<compile_context>
chip_gen: v7x
topology: tpu7x:2x2x1
jax: 0.10.0
libtpu: 0.0.40
codegen_flags: <defaults>
</compile_context>

<pallas_src>
import jax
import jax.numpy as jnp
import numpy as np
from jax import lax
from jax.experimental import pallas as pl

VERY_SMALL_NUMBER = 1e-12
NEG_PAD = -1e30          # pad bias for unused logit lanes (exp underflows to 0)

# ---- "config" (small, consistent with GraphClf.__init__) -------------------
N         = 64     # number of graph nodes
NFEAT     = 32     # config['num_feat']
HIDDEN    = 32     # config['hidden_size']
NCLASS    = 8      # config['num_class']
NUM_PERS  = 4      # config['graph_learn_num_pers']
EPS       = 0.1    # config['graph_learn_epsilon']  (ThresholdSparsify)
SKIP_CONN = 0.8    # config['graph_skip_conn']

# ---- packed-parameter layout: 128 lanes wide, 8-sublane-aligned sections ----
P_COLS   = NUM_PERS * NFEAT          # 128 (lane-dense)
OFF_WCOS = 0                         # row 0       : wcos flattened (1, 128)
OFF_WSQ  = 8                         # rows 8..39  : wcos^2 as (NFEAT, NUM_PERS)
OFF_EXP  = 40                        # rows 40..43 : group-expansion E (NUM_PERS, 128)
OFF_W1   = 48                        # rows 48..79 : W1 (NFEAT, HIDDEN)
OFF_B1   = 80                        # row 80      : b1 (1, HIDDEN)
OFF_W2   = 88                        # rows 88..119: W2 padded (HIDDEN, 128)
OFF_B2   = 120                       # row 120     : b2 padded (1, 128)
P_ROWS   = 128


def pack_params(wcos, w1, b1, w2, b2):
    """Pack all small parameters into one lane-dense (P_ROWS, 128) f32 buffer."""
    wcos = np.asarray(wcos, np.float32)
    buf = np.zeros((P_ROWS, P_COLS), np.float32)
    # wcos flattened: lane p*NFEAT+d holds wcos[p, d]  (matches concat([x]*P)).
    buf[OFF_WCOS, :NUM_PERS * NFEAT] = wcos.reshape(-1)
    # wcos^2 oriented (NFEAT, NUM_PERS) so ssq = (x*x) @ wsq is a plain matmul.
    buf[OFF_WSQ:OFF_WSQ + NFEAT, :NUM_PERS] = (wcos * wcos).T
    # group-expansion matrix: E[p, p*NFEAT:(p+1)*NFEAT] = 1.
    for p in range(NUM_PERS):
        buf[OFF_EXP + p, p * NFEAT:(p + 1) * NFEAT] = 1.0
    buf[OFF_W1:OFF_W1 + NFEAT, :HIDDEN] = np.asarray(w1, np.float32)
    buf[OFF_B1, :HIDDEN]                = np.asarray(b1, np.float32).reshape(-1)
    # W2 / b2 padded to 128 output lanes; pad bias = NEG_PAD so log_softmax
    # over 128 lanes equals log_softmax over the NCLASS real lanes.
    buf[OFF_W2:OFF_W2 + HIDDEN, :NCLASS] = np.asarray(w2, np.float32)
    buf[OFF_B2, :NCLASS]                 = np.asarray(b2, np.float32).reshape(-1)
    buf[OFF_B2, NCLASS:]                 = NEG_PAD
    return jnp.asarray(buf)


def graphclf_kernel(x_ref, params_ref, init_adj_ref, out_ref, adj_ref):
    x = x_ref[...]                                               # (N, NFEAT) f32

    # ---- direct ref-slice loads (8-aligned windows, no full-buffer slice) ---
    wcos_row = params_ref[OFF_WCOS:OFF_WCOS + 1, :]              # (1, 128)
    wsq      = params_ref[OFF_WSQ:OFF_WSQ + NFEAT, :NUM_PERS]    # (NFEAT, P)
    expand   = params_ref[OFF_EXP:OFF_EXP + NUM_PERS, :]         # (P, 128)
    w1       = params_ref[OFF_W1:OFF_W1 + NFEAT, :HIDDEN]        # (NFEAT, H)
    b1       = params_ref[OFF_B1:OFF_B1 + 1, :HIDDEN]            # (1, H)
    w2p      = params_ref[OFF_W2:OFF_W2 + HIDDEN, :]             # (H, 128) padded
    b2p      = params_ref[OFF_B2:OFF_B2 + 1, :]                  # (1, 128) padded

    # ---- WeightedCosine metric ----------------------------------------------
    # per-perspective sum-of-squares via one tiny MXU matmul (no XLU reduces)
    ssq = jnp.dot(x * x, wsq, preferred_element_type=jnp.float32)        # (N, P)
    inv = lax.rsqrt(jnp.maximum(ssq, VERY_SMALL_NUMBER ** 2))            # (N, P)
    # lane-expand per-group inverse norms with another tiny MXU matmul
    inv128 = jnp.dot(inv, expand, preferred_element_type=jnp.float32)    # (N, 128)

    x128 = jnp.concatenate([x] * NUM_PERS, axis=-1)                      # (N, 128)
    xn = x128 * wcos_row * inv128                                        # normalized slabs

    # attn[n, m] = (1/P) * sum_p cos_p(n, m); single K = 128 MXU contraction.
    # NOTE: verify with pl.lower_as_mlir whether a vxpose of the RHS is emitted.
    attn = lax.dot_general(
        xn, xn,
        dimension_numbers=(((1,), (1,)), ((), ())),
        preferred_element_type=jnp.float32) * (1.0 / NUM_PERS)

    # ---- ThresholdSparsify + row normalization + skip connection ------------
    raw_adj = jnp.where(attn < EPS, 0.0, attn)
    row_sum = jnp.sum(raw_adj, axis=-1, keepdims=True)
    inv_row = pl.reciprocal(jnp.maximum(row_sum, VERY_SMALL_NUMBER),
                            approx=False)
    adj = raw_adj * inv_row
    adj = (1.0 - SKIP_CONN) * adj + SKIP_CONN * init_adj_ref[...]

    # ---- 2-layer GCN encoder (output = adj @ (x W) + b, as in IDGL's GCN) ---
    xw1 = jnp.dot(x, w1, preferred_element_type=jnp.float32)             # (N, H)
    h = jnp.maximum(
        jnp.dot(adj, xw1, preferred_element_type=jnp.float32) + b1, 0.0)  # ReLU
    hw2 = jnp.dot(h, w2p, preferred_element_type=jnp.float32)            # (N, 128)
    o = jnp.dot(adj, hw2, preferred_element_type=jnp.float32) + b2p      # (N, 128)

    # ---- log_softmax over (padded) class lanes -------------------------------
    m = jnp.max(o, axis=-1, keepdims=True)
    z = o - m
    lse = jnp.log(jnp.sum(jnp.exp(z), axis=-1, keepdims=True))
    out_ref[...] = z - lse                      # lane-dense (N, 128) store
    adj_ref[...] = adj


def graphclf_forward(x, params, init_adj):
    # Single step, whole arrays in VMEM (no grid): ~0.1 MiB resident set,
    # so there is nothing to pipeline and no tiling is needed on any TPU gen.
    out_pad, adj = pl.pallas_call(
        graphclf_kernel,
        out_shape=(jax.ShapeDtypeStruct((N, P_COLS), jnp.float32),
                   jax.ShapeDtypeStruct((N, N), jnp.float32)),
    )(x, params, init_adj)
    return out_pad[:, :NCLASS], adj


# -------------------------- pure-JAX reference -------------------------------
def graphclf_ref(x, wcos, init_adj, w1, b1, w2, b2):
    xf = x[None, :, :] * wcos[:, None, :]                        # (P, N, D)
    nrm = jnp.sqrt(jnp.sum(xf * xf, axis=-1, keepdims=True))
    xn = xf / jnp.maximum(nrm, VERY_SMALL_NUMBER)
    attn = jnp.mean(jnp.einsum('pnd,pmd->pnm', xn, xn), axis=0)  # (N, N)
    raw_adj = jnp.where(attn < EPS, 0.0, attn)
    adj = raw_adj / jnp.maximum(jnp.sum(raw_adj, -1, keepdims=True),
                                VERY_SMALL_NUMBER)
    adj = (1.0 - SKIP_CONN) * adj + SKIP_CONN * init_adj
    h = jnp.maximum(adj @ (x @ w1) + b1, 0.0)
    o = adj @ (h @ w2) + b2
    out = jax.nn.log_softmax(o, axis=-1)
    return out, adj


if __name__ == "__main__":
    key = jax.random.PRNGKey(0)
    k_x, k_w, k_a, k_w1, k_b1, k_w2, k_b2 = jax.random.split(key, 7)

    # node features
    x = jax.random.normal(k_x, (N, NFEAT), jnp.float32)

    # WeightedCosine weight_tensor (xavier-uniform style, deterministic)
    bnd = float(np.sqrt(6.0 / (NUM_PERS + NFEAT)))
    wcos = jax.random.uniform(k_w, (NUM_PERS, NFEAT), jnp.float32, -bnd, bnd)

    # init_adj: symmetric random graph with self-loops, row-normalized
    a = (jax.random.uniform(k_a, (N, N)) < 0.1).astype(jnp.float32)
    a = jnp.maximum(a, a.T) + jnp.eye(N, dtype=jnp.float32)
    init_adj = a / jnp.sum(a, axis=-1, keepdims=True)

    # GCN parameters (deterministic glorot-ish init, small random biases)
    b1_gcn = float(np.sqrt(6.0 / (NFEAT + HIDDEN)))
    w1 = jax.random.uniform(k_w1, (NFEAT, HIDDEN), jnp.float32, -b1_gcn, b1_gcn)
    b1 = jax.random.uniform(k_b1, (1, HIDDEN), jnp.float32, -0.1, 0.1)
    b2_gcn = float(np.sqrt(6.0 / (HIDDEN + NCLASS)))
    w2 = jax.random.uniform(k_w2, (HIDDEN, NCLASS), jnp.float32, -b2_gcn, b2_gcn)
    b2 = jax.random.uniform(k_b2, (1, NCLASS), jnp.float32, -0.1, 0.1)

    # pack parameters once (offline) -> single lane-dense DMA'd buffer
    params = pack_params(np.asarray(wcos), np.asarray(w1), np.asarray(b1),
                         np.asarray(w2), np.asarray(b2))

    out, adj = graphclf_forward(x, params, init_adj)
    jax.block_until_ready((out, adj))

    out_ref, adj_ref = graphclf_ref(x, wcos, init_adj, w1, b1, w2, b2)
    np.testing.assert_allclose(np.asarray(out), np.asarray(out_ref),
                               rtol=1e-4, atol=1e-4)
    np.testing.assert_allclose(np.asarray(adj), np.asarray(adj_ref),
                               rtol=1e-4, atol=1e-4)

    print("KERNEL_OK")
</pallas_src>

<mosaic_0001>
module attributes {stable_mosaic.version = 11 : i64} {
  func.func @graphclf_kernel(%arg0: memref<64x32xf32, #tpu.memory_space<vmem>>, %arg1: memref<128x128xf32, #tpu.memory_space<vmem>>, %arg2: memref<64x64xf32, #tpu.memory_space<vmem>>, %arg3: memref<64x128xf32, #tpu.memory_space<vmem>>, %arg4: memref<64x64xf32, #tpu.memory_space<vmem>>) attributes {dimension_semantics = [], scalar_prefetch = 0 : i64, scratch_operands = 0 : i64, tpu.core_type = #tpu.core_type<tc>} {
    %c0 = arith.constant 0 : index
    %c0_0 = arith.constant 0 : index
    %0 = vector.load %arg0[%c0, %c0_0] : memref<64x32xf32, #tpu.memory_space<vmem>>, vector<64x32xf32>
    %c0_1 = arith.constant 0 : index
    %c0_2 = arith.constant 0 : index
    %1 = vector.load %arg1[%c0_1, %c0_2] : memref<128x128xf32, #tpu.memory_space<vmem>>, vector<1x128xf32>
    %c8 = arith.constant 8 : index
    %c0_3 = arith.constant 0 : index
    %2 = vector.load %arg1[%c8, %c0_3] : memref<128x128xf32, #tpu.memory_space<vmem>>, vector<32x4xf32>
    %c40 = arith.constant 40 : index
    %c0_4 = arith.constant 0 : index
    %3 = vector.load %arg1[%c40, %c0_4] : memref<128x128xf32, #tpu.memory_space<vmem>>, vector<4x128xf32>
    %c48 = arith.constant 48 : index
    %c0_5 = arith.constant 0 : index
    %4 = vector.load %arg1[%c48, %c0_5] : memref<128x128xf32, #tpu.memory_space<vmem>>, vector<32x32xf32>
    %c80 = arith.constant 80 : index
    %c0_6 = arith.constant 0 : index
    %5 = vector.load %arg1[%c80, %c0_6] : memref<128x128xf32, #tpu.memory_space<vmem>>, vector<1x32xf32>
    %c88 = arith.constant 88 : index
    %c0_7 = arith.constant 0 : index
    %6 = vector.load %arg1[%c88, %c0_7] : memref<128x128xf32, #tpu.memory_space<vmem>>, vector<32x128xf32>
    %c120 = arith.constant 120 : index
    %c0_8 = arith.constant 0 : index
    %7 = vector.load %arg1[%c120, %c0_8] : memref<128x128xf32, #tpu.memory_space<vmem>>, vector<1x128xf32>
    %8 = arith.mulf %0, %0 : vector<64x32xf32>
    %cst = arith.constant dense<0.000000e+00> : vector<64x4xf32>
    %9 = tpu.matmul %8, %2, %cst {dimension_numbers = #tpu.dot_dimension_numbers<[1], [0], [0], [1], [0, 0, 1, 1], [], []>} : vector<64x32xf32>, vector<32x4xf32>, vector<64x4xf32> -> vector<64x4xf32>
    %cst_9 = arith.constant 1.000000e-24 : f32
    %10 = vector.broadcast %cst_9 : f32 to vector<64x4xf32>
    %11 = arith.maximumf %9, %10 : vector<64x4xf32>
    %12 = math.rsqrt %11 : vector<64x4xf32>
    %cst_10 = arith.constant dense<0.000000e+00> : vector<64x128xf32>
    %13 = tpu.matmul %12, %3, %cst_10 {dimension_numbers = #tpu.dot_dimension_numbers<[1], [0], [0], [1], [0, 0, 1, 1], [], []>} : vector<64x4xf32>, vector<4x128xf32>, vector<64x128xf32> -> vector<64x128xf32>
    %14 = tpu.concatenate %0, %0, %0, %0 in 1 : vector<64x32xf32>, vector<64x32xf32>, vector<64x32xf32>, vector<64x32xf32> -> vector<64x128xf32>
    %15 = vector.broadcast %1 : vector<1x128xf32> to vector<64x128xf32>
    %16 = arith.mulf %14, %15 : vector<64x128xf32>
    %17 = arith.mulf %16, %13 : vector<64x128xf32>
    %cst_11 = arith.constant dense<0.000000e+00> : vector<64x64xf32>
    %18 = tpu.matmul %17, %17, %cst_11 {dimension_numbers = #tpu.dot_dimension_numbers<[1], [1], [0], [0], [0, 0, 1, 0], [], []>} : vector<64x128xf32>, vector<64x128xf32>, vector<64x64xf32> -> vector<64x64xf32>
    %cst_12 = arith.constant 2.500000e-01 : f32
    %19 = vector.broadcast %cst_12 : f32 to vector<64x64xf32>
    %20 = arith.mulf %18, %19 : vector<64x64xf32>
    %cst_13 = arith.constant 1.000000e-01 : f32
    %21 = vector.broadcast %cst_13 : f32 to vector<64x64xf32>
    %22 = arith.cmpf olt, %20, %21 : vector<64x64xf32>
    %cst_14 = arith.constant 0.000000e+00 : f32
    %23 = vector.broadcast %cst_14 : f32 to vector<64x64xf32>
    %24 = arith.select %22, %23, %20 : vector<64x64xi1>, vector<64x64xf32>
    %cst_15 = arith.constant dense<0.000000e+00> : vector<64xf32>
    %25 = vector.multi_reduction <add>, %24, %cst_15 [1] : vector<64x64xf32> to vector<64xf32>
    %26 = vector.shape_cast %25 : vector<64xf32> to vector<64x1xf32>
    %cst_16 = arith.constant 9.99999996E-13 : f32
    %27 = vector.broadcast %cst_16 : f32 to vector<64x1xf32>
    %28 = arith.maximumf %26, %27 : vector<64x1xf32>
    %29 = tpu.reciprocal %28 : vector<64x1xf32> -> vector<64x1xf32>
    %30 = vector.broadcast %29 : vector<64x1xf32> to vector<64x64xf32>
    %31 = arith.mulf %24, %30 : vector<64x64xf32>
    %cst_17 = arith.constant 2.000000e-01 : f32
    %32 = vector.broadcast %cst_17 : f32 to vector<64x64xf32>
    %33 = arith.mulf %32, %31 : vector<64x64xf32>
    %c0_18 = arith.constant 0 : index
    %c0_19 = arith.constant 0 : index
    %34 = vector.load %arg2[%c0_18, %c0_19] : memref<64x64xf32, #tpu.memory_space<vmem>>, vector<64x64xf32>
    %cst_20 = arith.constant 8.000000e-01 : f32
    %35 = vector.broadcast %cst_20 : f32 to vector<64x64xf32>
    %36 = arith.mulf %35, %34 : vector<64x64xf32>
    %37 = arith.addf %33, %36 : vector<64x64xf32>
    %cst_21 = arith.constant dense<0.000000e+00> : vector<64x32xf32>
    %38 = tpu.matmul %0, %4, %cst_21 {dimension_numbers = #tpu.dot_dimension_numbers<[1], [0], [0], [1], [0, 0, 1, 1], [], []>} : vector<64x32xf32>, vector<32x32xf32>, vector<64x32xf32> -> vector<64x32xf32>
    %cst_22 = arith.constant dense<0.000000e+00> : vector<64x32xf32>
    %39 = tpu.matmul %37, %38, %cst_22 {dimension_numbers = #tpu.dot_dimension_numbers<[1], [0], [0], [1], [0, 0, 1, 1], [], []>} : vector<64x64xf32>, vector<64x32xf32>, vector<64x32xf32> -> vector<64x32xf32>
    %40 = vector.broadcast %5 : vector<1x32xf32> to vector<64x32xf32>
    %41 = arith.addf %39, %40 : vector<64x32xf32>
    %cst_23 = arith.constant 0.000000e+00 : f32
    %42 = vector.broadcast %cst_23 : f32 to vector<64x32xf32>
    %43 = arith.maximumf %41, %42 : vector<64x32xf32>
    %cst_24 = arith.constant dense<0.000000e+00> : vector<64x128xf32>
    %44 = tpu.matmul %43, %6, %cst_24 {dimension_numbers = #tpu.dot_dimension_numbers<[1], [0], [0], [1], [0, 0, 1, 1], [], []>} : vector<64x32xf32>, vector<32x128xf32>, vector<64x128xf32> -> vector<64x128xf32>
    %cst_25 = arith.constant dense<0.000000e+00> : vector<64x128xf32>
    %45 = tpu.matmul %37, %44, %cst_25 {dimension_numbers = #tpu.dot_dimension_numbers<[1], [0], [0], [1], [0, 0, 1, 1], [], []>} : vector<64x64xf32>, vector<64x128xf32>, vector<64x128xf32> -> vector<64x128xf32>
    %46 = vector.broadcast %7 : vector<1x128xf32> to vector<64x128xf32>
    %47 = arith.addf %45, %46 : vector<64x128xf32>
    %cst_26 = arith.constant dense<0xFF800000> : vector<64xf32>
    %48 = vector.multi_reduction <maximumf>, %47, %cst_26 [1] : vector<64x128xf32> to vector<64xf32>
    %49 = vector.shape_cast %48 : vector<64xf32> to vector<64x1xf32>
    %50 = vector.broadcast %49 : vector<64x1xf32> to vector<64x128xf32>
    %51 = arith.subf %47, %50 : vector<64x128xf32>
    %52 = math.exp %51 : vector<64x128xf32>
    %cst_27 = arith.constant dense<0.000000e+00> : vector<64xf32>
    %53 = vector.multi_reduction <add>, %52, %cst_27 [1] : vector<64x128xf32> to vector<64xf32>
    %54 = vector.shape_cast %53 : vector<64xf32> to vector<64x1xf32>
    %55 = math.log %54 : vector<64x1xf32>
    %56 = vector.broadcast %55 : vector<64x1xf32> to vector<64x128xf32>
    %57 = arith.subf %51, %56 : vector<64x128xf32>
    %c0_28 = arith.constant 0 : index
    %c0_29 = arith.constant 0 : index
    %58 = vector.load %arg3[%c0_28, %c0_29] : memref<64x128xf32, #tpu.memory_space<vmem>>, vector<64x128xf32>
    tpu.vector_store %arg3[%c0_28, %c0_29], %57 {strides = array<i32>} : memref<64x128xf32, #tpu.memory_space<vmem>>, vector<64x128xf32>,
    %c0_30 = arith.constant 0 : index
    %c0_31 = arith.constant 0 : index
    %59 = vector.load %arg4[%c0_30, %c0_31] : memref<64x64xf32, #tpu.memory_space<vmem>>, vector<64x64xf32>
    tpu.vector_store %arg4[%c0_30, %c0_31], %37 {strides = array<i32>} : memref<64x64xf32, #tpu.memory_space<vmem>>, vector<64x64xf32>,
    return
  }
}

</mosaic_0001>

<llo_original>
// kernel: tpu_custom_call.1
$region0: #{tpu_custom_call.1}
  #allocation0 [shape = 'u32[]', space=smem, size = 0x4, offset = 0x4, fixed_abs, tag = 'smem constant byte address 0x4 - core index']
  #allocation1 [shape = 'u32[144,128]{1,0:T(1,128)}', space=vmem, size = 0x12000, scoped, tag = 'internal scratch']
  %s0 = inlined_call_operand.vmem [shape: f32[64,32], index: 0, kind: input, shape index: {}]
  %s1 = inlined_call_operand.hbm [shape: f32[128,128], index: 1, kind: input, shape index: {}]
  %s2 = inlined_call_operand.vmem [shape: f32[64,64], index: 2, kind: input, shape index: {}]
  %s3 = inlined_call_operand.hbm [shape: f32[64,128], index: 3, kind: output, shape index: {0}]
  %s4 = inlined_call_operand.hbm [shape: f32[64,64], index: 4, kind: output, shape index: {1}]
  %5 = xla_tuple %s3, %s4
  %s6 = sld [smem:[#allocation0]]
  $region34: #{tpu_custom_call.1} parent=0
    _
  %s8 = ssub.s32 1, %s6
  %s9 = scalar_select 0, %s8, %s6
  $region1: #{tpu_custom_call.1} parent=0
    #allocation2 [shape = 'u8[65536]{0}', space=vmem, size = 0x10000, scoped, tag = 'input window, operand 1, single buffered']
    #allocation3 [shape = 's32[1]{0}', space=sflag, size = 0x4, scoped, tag = 'scoped memory for tpu_custom_call.1']
    #allocation4 [shape = 's32[1]{0}', space=sflag, size = 0x4, scoped, tag = 'scoped memory for tpu_custom_call.1']
    #allocation5 [shape = 'u8[32768]{0}', space=vmem, size = 0x8000, scoped, tag = 'output window, operand 0, single buffered']
    #allocation6 [shape = 'u8[32768]{0}', space=vmem, size = 0x8000, scoped, tag = 'output window, operand 1, single buffered']
    #allocation7 [shape = 's32[1]{0}', space=sflag, size = 0x4, scoped, tag = 'scoped memory for tpu_custom_call.1']
    %10 = vsyncpa [#allocation3], 0
    %11 = vsyncpa [#allocation4], 0
    %12 = vsyncpa [#allocation7], 0
    // Predicated region
    $region2: #{tpu_custom_call.1} parent=1 // pred_check
      _
    $region3: #{tpu_custom_call.1} parent=1 // pred_check_branch
      %14 = sbr.rel (0) target = $region5
    $region4: #{tpu_custom_call.1} parent=1 // pred_region
      _
    $region5: #{tpu_custom_call.1} parent=1 // pred_fallthru
      _
    // Predicated region
    $region6: #{tpu_custom_call.1} parent=1 // pred_check
      _
    $region7: #{tpu_custom_call.1} parent=1 // pred_check_branch
      %16 = sbr.rel (0) target = $region9
    $region8: #{tpu_custom_call.1} parent=1 // pred_region
      %s18 = ssub.s32 2048, 2048
      %19 = vsyncadd [#allocation3], %s18
      %s20 = sshll.u32 [#allocation2], 4
      %s21 = int_to_ptr.vmem [resolvable:$true] %s20
      %26 = dma.hbm_to_vmem [thread:$0]  %s1, 2048, %s21, [#allocation3], 128, 128, 8
    $region9: #{tpu_custom_call.1} parent=1 // pred_fallthru
      _
    // Predicated region
    $region10: #{tpu_custom_call.1} parent=1 // pred_check
      _
    $region11: #{tpu_custom_call.1} parent=1 // pred_check_branch
      %28 = sbr.rel (0) target = $region13
    $region12: #{tpu_custom_call.1} parent=1 // pred_region
      _
    $region13: #{tpu_custom_call.1} parent=1 // pred_fallthru
      _
    // Predicated region
    $region14: #{tpu_custom_call.1} parent=1 // pred_check
      _
    $region15: #{tpu_custom_call.1} parent=1 // pred_check_branch
      %30 = sbr.rel (0) target = $region17
    $region16: #{tpu_custom_call.1} parent=1 // pred_region
      %31 = dma.done [#allocation3], 2048
    $region17: #{tpu_custom_call.1} parent=1 // pred_fallthru
      _
    %v32 = vld [vmem:[%s0] sm:$0xff]
    %v33 = vld [vmem:[%s0 + $0x8] sm:$0xff]
    %v34 = vld [vmem:[%s0 + $0x10] sm:$0xff]
    %v35 = vld [vmem:[%s0 + $0x18] sm:$0xff]
    %v36 = vld [vmem:[%s0 + $0x20] sm:$0xff]
    %v37 = vld [vmem:[%s0 + $0x28] sm:$0xff]
    %v38 = vld [vmem:[%s0 + $0x30] sm:$0xff]
    %v39 = vld [vmem:[%s0 + $0x38] sm:$0xff]
    %v40 = vld [vmem:[#allocation2] sm:$0x1]
    %v41 = vld [vmem:[#allocation2 + $0x8] sm:$0xff]
    %v42 = vld [vmem:[#allocation2 + $0x10] sm:$0xff]
    %v43 = vld [vmem:[#allocation2 + $0x18] sm:$0xff]
    %v44 = vld [vmem:[#allocation2 + $0x20] sm:$0xff]
    %v45 = vld [vmem:[#allocation2 + $0x28] sm:$0xf]
    %v46 = vld [vmem:[#allocation2 + $0x30] sm:$0xff]
    %v47 = vld [vmem:[#allocation2 + $0x38] sm:$0xff]
    %v48 = vld [vmem:[#allocation2 + $0x40] sm:$0xff]
    %v49 = vld [vmem:[#allocation2 + $0x48] sm:$0xff]
    %v50 = vld [vmem:[#allocation2 + $0x50] sm:$0x1]
    %v51 = vld [vmem:[#allocation2 + $0x58] sm:$0xff]
    %v52 = vld [vmem:[#allocation2 + $0x60] sm:$0xff]
    %v53 = vld [vmem:[#allocation2 + $0x68] sm:$0xff]
    %v54 = vld [vmem:[#allocation2 + $0x70] sm:$0xff]
    %v55 = vld [vmem:[#allocation2 + $0x78] sm:$0x1]
    %v56 = vmul.f32 %v32, %v32
    %v57 = vmul.f32 %v33, %v33
    %v58 = vmul.f32 %v34, %v34
    %v59 = vmul.f32 %v35, %v35
    %v60 = vmul.f32 %v36, %v36
    %v61 = vmul.f32 %v37, %v37
    %v62 = vmul.f32 %v38, %v38
    %v63 = vmul.f32 %v39, %v39
    %vm64 = vcmask 261120
    %v66 = vsel %vm64, %v56, 0
    %v69 = vsel %vm64, %v57, 0
    %v72 = vsel %vm64, %v58, 0
    %v75 = vsel %vm64, %v59, 0
    %v78 = vsel %vm64, %v60, 0
    %v81 = vsel %vm64, %v61, 0
    %v84 = vsel %vm64, %v62, 0
    %v87 = vsel %vm64, %v63, 0
    %89 = vmatprep.subr.mxu0 0.0
    %90 = vmatpush1.msra.mxu0 %v41
    %91 = vmatprep.subr.mxu0 0.0
    %92 = vmatpush1.msra.mxu0 %v42
    %93 = vmatprep.subr.mxu0 0.0
    %94 = vmatpush1.msra.mxu0 %v43
    %95 = vmatprep.subr.mxu0 0.0
    %96 = vmatpush1.msra.mxu0 %v44
    %97 = vmatprep.subr.mxu0 0.0
    %98 = vmatpush1.msra.mxu0 0.0
    %99 = vmatprep.subr.mxu0 0.0
    %100 = vmatpush1.msra.mxu0 0.0
    %101 = vmatprep.subr.mxu0 0.0
    %102 = vmatpush1.msra.mxu0 0.0
    %103 = vmatprep.subr.mxu0 0.0
    %104 = vmatpush1.msra.mxu0 0.0
    %105 = vmatprep.subr.mxu0 0.0
    %106 = vmatpush1.msra.mxu0 0.0
    %107 = vmatprep.subr.mxu0 0.0
    %108 = vmatpush1.msra.mxu0 0.0
    %109 = vmatprep.subr.mxu0 0.0
    %110 = vmatpush1.msra.mxu0 0.0
    %111 = vmatprep.subr.mxu0 0.0
    %112 = vmatpush1.msra.mxu0 0.0
    %113 = vmatprep.subr.mxu0 0.0
    %114 = vmatpush1.msra.mxu0 0.0
    %115 = vmatprep.subr.mxu0 0.0
    %116 = vmatpush1.msra.mxu0 0.0
    %117 = vmatprep.subr.mxu0 0.0
    %118 = vmatpush1.msra.mxu0 0.0
    %119 = vmatprep.subr.mxu0 0.0
    %120 = vmatpush1.msra.mxu0 0.0
    %121 = vmatprep.subr.mxu0 0.0
    %122 = vmatpush1.msra.mxu0 0.0
    %123 = vmatprep.subr.mxu0 0.0
    %124 = vmatpush1.msra.mxu0 0.0
    %125 = vmatprep.subr.mxu0 0.0
    %126 = vmatpush1.msra.mxu0 0.0
    %127 = vmatprep.subr.mxu0 0.0
    %128 = vmatpush1.msra.mxu0 0.0
    %129 = vmatprep.subr.mxu0 0.0
    %130 = vmatpush1.msra.mxu0 0.0
    %131 = vmatprep.subr.mxu0 0.0
    %132 = vmatpush1.msra.mxu0 0.0
    %133 = vmatprep.subr.mxu0 0.0
    %134 = vmatpush1.msra.mxu0 0.0
    %135 = vmatprep.subr.mxu0 0.0
    %136 = vmatpush1.msra.mxu0 0.0
    %137 = vmatprep.subr.mxu0 0.0
    %138 = vmatpush1.msra.mxu0 0.0
    %139 = vmatprep.subr.mxu0 0.0
    %140 = vmatpush1.msra.mxu0 0.0
    %141 = vmatprep.subr.mxu0 0.0
    %142 = vmatpush1.msra.mxu0 0.0
    %143 = vmatprep.subr.mxu0 0.0
    %144 = vmatpush1.msra.mxu0 0.0
    %145 = vmatprep.subr.mxu0 0.0
    %146 = vmatpush1.msra.mxu0 0.0
    %147 = vmatprep.subr.mxu0 0.0
    %148 = vmatpush1.msra.mxu0 0.0
    %149 = vmatprep.subr.mxu0 0.0
    %150 = vmatpush1.msra.mxu0 0.0
    %151 = vmatprep.subr.mxu0 0.0
    %152 = vmatpush1.msra.mxu0 0.0
    %153 = vmatprep.mubr.f32.mxu0 0.0
    %154 = vmatmul.mubr.f32.gmra.mrb[0].mxu0 %v66
    %v155 = vpop.f32.mrb[0].mxu0
    %v156 = vadd.f32 0.0, %v155
    %v157 = vpop.f32.mrb[0].mxu0
    %158 = vmatprep.mubr.f32.mxu0 0.0
    %159 = vmatmul.mubr.f32.gmra.mrb[0].mxu0 %v69
    %v160 = vpop.f32.mrb[0].mxu0
    %v161 = vadd.f32 0.0, %v160
    %v162 = vpop.f32.mrb[0].mxu0
    %163 = vmatprep.mubr.f32.mxu0 0.0
    %164 = vmatmul.mubr.f32.gmra.mrb[0].mxu0 %v72
    %v165 = vpop.f32.mrb[0].mxu0
    %v166 = vadd.f32 0.0, %v165
    %v167 = vpop.f32.mrb[0].mxu0
    %168 = vmatprep.mubr.f32.mxu0 0.0
    %169 = vmatmul.mubr.f32.gmra.mrb[0].mxu0 %v75
    %v170 = vpop.f32.mrb[0].mxu0
    %v171 = vadd.f32 0.0, %v170
    %v172 = vpop.f32.mrb[0].mxu0
    %173 = vmatprep.mubr.f32.mxu0 0.0
    %174 = vmatmul.mubr.f32.gmra.mrb[0].mxu0 %v78
    %v175 = vpop.f32.mrb[0].mxu0
    %v176 = vadd.f32 0.0, %v175
    %v177 = vpop.f32.mrb[0].mxu0
    %178 = vmatprep.mubr.f32.mxu0 0.0
    %179 = vmatmul.mubr.f32.gmra.mrb[0].mxu0 %v81
    %v180 = vpop.f32.mrb[0].mxu0
    %v181 = vadd.f32 0.0, %v180
    %v182 = vpop.f32.mrb[0].mxu0
    %183 = vmatprep.mubr.f32.mxu0 0.0
    %184 = vmatmul.mubr.f32.gmra.mrb[0].mxu0 %v84
    %v185 = vpop.f32.mrb[0].mxu0
    %v186 = vadd.f32 0.0, %v185
    %v187 = vpop.f32.mrb[0].mxu0
    %188 = vmatprep.mubr.f32.mxu0 0.0
    %189 = vmatmul.mubr.f32.gmra.mrb[0].mxu0 %v87
    %v190 = vpop.f32.mrb[0].mxu0
    %v191 = vadd.f32 0.0, %v190
    %v192 = vpop.f32.mrb[0].mxu0
    %193 = vdwg.mxu0
    %v194 = vmax.f32 %v156, 1e-24
    %v195 = vmax.f32 %v161, 1e-24
    %v196 = vmax.f32 %v166, 1e-24
    %v197 = vmax.f32 %v171, 1e-24
    %v198 = vmax.f32 %v176, 1e-24
    %v199 = vmax.f32 %v181, 1e-24
    %v200 = vmax.f32 %v186, 1e-24
    %v201 = vmax.f32 %v191, 1e-24
    %v202 = vrsqrt.pop %v194
    %v203 = vrsqrt.pop %v195
    %v204 = vrsqrt.pop %v196
    %v205 = vrsqrt.pop %v197
    %v206 = vrsqrt.pop %v198
    %v207 = vrsqrt.pop %v199
    %v208 = vrsqrt.pop %v200
    %v209 = vrsqrt.pop %v201
    %vm210 = vcmask 31744
    %v212 = vsel %vm210, %v202, 0
    %v215 = vsel %vm210, %v203, 0
    %v218 = vsel %vm210, %v204, 0
    %v221 = vsel %vm210, %v205, 0
    %v224 = vsel %vm210, %v206, 0
    %v227 = vsel %vm210, %v207, 0
    %v230 = vsel %vm210, %v208, 0
    %v233 = vsel %vm210, %v209, 0
    %vm235 = vcmask 1043456
    %v237 = vsel %vm235, %v45, 0
    %239 = vmatprep.subr.mxu0 0.0
    %240 = vmatpush1.msra.mxu0 %v237
    %241 = vmatprep.subr.mxu0 0.0
    %242 = vmatpush1.msra.mxu0 0.0
    %243 = vmatprep.subr.mxu0 0.0
    %244 = vmatpush1.msra.mxu0 0.0
    %245 = vmatprep.subr.mxu0 0.0
    %246 = vmatpush1.msra.mxu0 0.0
    %247 = vmatprep.subr.mxu0 0.0
    %248 = vmatpush1.msra.mxu0 0.0
    %249 = vmatprep.subr.mxu0 0.0
    %250 = vmatpush1.msra.mxu0 0.0
    %251 = vmatprep.subr.mxu0 0.0
    %252 = vmatpush1.msra.mxu0 0.0
    %253 = vmatprep.subr.mxu0 0.0
    %254 = vmatpush1.msra.mxu0 0.0
    %255 = vmatprep.subr.mxu0 0.0
    %256 = vmatpush1.msra.mxu0 0.0
    %257 = vmatprep.subr.mxu0 0.0
    %258 = vmatpush1.msra.mxu0 0.0
    %259 = vmatprep.subr.mxu0 0.0
    %260 = vmatpush1.msra.mxu0 0.0
    %261 = vmatprep.subr.mxu0 0.0
    %262 = vmatpush1.msra.mxu0 0.0
    %263 = vmatprep.subr.mxu0 0.0
    %264 = vmatpush1.msra.mxu0 0.0
    %265 = vmatprep.subr.mxu0 0.0
    %266 = vmatpush1.msra.mxu0 0.0
    %267 = vmatprep.subr.mxu0 0.0
    %268 = vmatpush1.msra.mxu0 0.0
    %269 = vmatprep.subr.mxu0 0.0
    %270 = vmatpush1.msra.mxu0 0.0
    %271 = vmatprep.subr.mxu0 0.0
    %272 = vmatpush1.msra.mxu0 0.0
    %273 = vmatprep.subr.mxu0 0.0
    %274 = vmatpush1.msra.mxu0 0.0
    %275 = vmatprep.subr.mxu0 0.0
    %276 = vmatpush1.msra.mxu0 0.0
    %277 = vmatprep.subr.mxu0 0.0
    %278 = vmatpush1.msra.mxu0 0.0
    %279 = vmatprep.subr.mxu0 0.0
    %280 = vmatpush1.msra.mxu0 0.0
    %281 = vmatprep.subr.mxu0 0.0
    %282 = vmatpush1.msra.mxu0 0.0
    %283 = vmatprep.subr.mxu0 0.0
    %284 = vmatpush1.msra.mxu0 0.0
    %285 = vmatprep.subr.mxu0 0.0
    %286 = vmatpush1.msra.mxu0 0.0
    %287 = vmatprep.subr.mxu0 0.0
    %288 = vmatpush1.msra.mxu0 0.0
    %289 = vmatprep.subr.mxu0 0.0
    %290 = vmatpush1.msra.mxu0 0.0
    %291 = vmatprep.subr.mxu0 0.0
    %292 = vmatpush1.msra.mxu0 0.0
    %293 = vmatprep.subr.mxu0 0.0
    %294 = vmatpush1.msra.mxu0 0.0
    %295 = vmatprep.subr.mxu0 0.0
    %296 = vmatpush1.msra.mxu0 0.0
    %297 = vmatprep.subr.mxu0 0.0
    %298 = vmatpush1.msra.mxu0 0.0
    %299 = vmatprep.subr.mxu0 0.0
    %300 = vmatpush1.msra.mxu0 0.0
    %301 = vmatprep.subr.mxu0 0.0
    %302 = vmatpush1.msra.mxu0 0.0
    %303 = vmatprep.mubr.f32.mxu0 0.0
    %304 = vmatmul.mubr.f32.gmra.mrb[0].mxu0 %v212
    %v305 = vpop.f32.mrb[0].mxu0
    %v306 = vadd.f32 0.0, %v305
    %v307 = vpop.f32.mrb[0].mxu0
    %308 = vmatprep.mubr.f32.mxu0 0.0
    %309 = vmatmul.mubr.f32.gmra.mrb[0].mxu0 %v215
    %v310 = vpop.f32.mrb[0].mxu0
    %v311 = vadd.f32 0.0, %v310
    %v312 = vpop.f32.mrb[0].mxu0
    %313 = vmatprep.mubr.f32.mxu0 0.0
    %314 = vmatmul.mubr.f32.gmra.mrb[0].mxu0 %v218
    %v315 = vpop.f32.mrb[0].mxu0
    %v316 = vadd.f32 0.0, %v315
    %v317 = vpop.f32.mrb[0].mxu0
    %318 = vmatprep.mubr.f32.mxu0 0.0
    %319 = vmatmul.mubr.f32.gmra.mrb[0].mxu0 %v221
    %v320 = vpop.f32.mrb[0].mxu0
    %v321 = vadd.f32 0.0, %v320
    %v322 = vpop.f32.mrb[0].mxu0
    %323 = vmatprep.mubr.f32.mxu0 0.0
    %324 = vmatmul.mubr.f32.gmra.mrb[0].mxu0 %v224
    %v325 = vpop.f32.mrb[0].mxu0
    %v326 = vadd.f32 0.0, %v325
    %v327 = vpop.f32.mrb[0].mxu0
    %328 = vmatprep.mubr.f32.mxu0 0.0
    %329 = vmatmul.mubr.f32.gmra.mrb[0].mxu0 %v227
    %v330 = vpop.f32.mrb[0].mxu0
    %v331 = vadd.f32 0.0, %v330
    %v332 = vpop.f32.mrb[0].mxu0
    %333 = vmatprep.mubr.f32.mxu0 0.0
    %334 = vmatmul.mubr.f32.gmra.mrb[0].mxu0 %v230
    %v335 = vpop.f32.mrb[0].mxu0
    %v336 = vadd.f32 0.0, %v335
    %v337 = vpop.f32.mrb[0].mxu0
    %338 = vmatprep.mubr.f32.mxu0 0.0
    %339 = vmatmul.mubr.f32.gmra.mrb[0].mxu0 %v233
    %v340 = vpop.f32.mrb[0].mxu0
    %v341 = vadd.f32 0.0, %v340
    %v342 = vpop.f32.mrb[0].mxu0
    %343 = vdwg.mxu0
    %352 = vrot.lane.b32.xlu0 %v32, 32
    %v353 = vpop.permute.xlu0 %352
    %354 = vrot.lane.b32.xlu0 %v33, 32
    %v355 = vpop.permute.xlu0 %354
    %356 = vrot.lane.b32.xlu0 %v34, 32
    %v357 = vpop.permute.xlu0 %356
    %358 = vrot.lane.b32.xlu0 %v35, 32
    %v359 = vpop.permute.xlu0 %358
    %360 = vrot.lane.b32.xlu0 %v36, 32
    %v361 = vpop.permute.xlu0 %360
    %362 = vrot.lane.b32.xlu0 %v37, 32
    %v363 = vpop.permute.xlu0 %362
    %364 = vrot.lane.b32.xlu0 %v38, 32
    %v365 = vpop.permute.xlu0 %364
    %366 = vrot.lane.b32.xlu0 %v39, 32
    %v367 = vpop.permute.xlu0 %366
    %376 = vrot.lane.b32.xlu0 %v32, 64
    %v377 = vpop.permute.xlu0 %376
    %378 = vrot.lane.b32.xlu0 %v33, 64
    %v379 = vpop.permute.xlu0 %378
    %380 = vrot.lane.b32.xlu0 %v34, 64
    %v381 = vpop.permute.xlu0 %380
    %382 = vrot.lane.b32.xlu0 %v35, 64
    %v383 = vpop.permute.xlu0 %382
    %384 = vrot.lane.b32.xlu0 %v36, 64
    %v385 = vpop.permute.xlu0 %384
    %386 = vrot.lane.b32.xlu0 %v37, 64
    %v387 = vpop.permute.xlu0 %386
    %388 = vrot.lane.b32.xlu0 %v38, 64
    %v389 = vpop.permute.xlu0 %388
    %390 = vrot.lane.b32.xlu0 %v39, 64
    %v391 = vpop.permute.xlu0 %390
    %400 = vrot.lane.b32.xlu0 %v32, 96
    %v401 = vpop.permute.xlu0 %400
    %402 = vrot.lane.b32.xlu0 %v33, 96
    %v403 = vpop.permute.xlu0 %402
    %404 = vrot.lane.b32.xlu0 %v34, 96
    %v405 = vpop.permute.xlu0 %404
    %406 = vrot.lane.b32.xlu0 %v35, 96
    %v407 = vpop.permute.xlu0 %406
    %408 = vrot.lane.b32.xlu0 %v36, 96
    %v409 = vpop.permute.xlu0 %408
    %410 = vrot.lane.b32.xlu0 %v37, 96
    %v411 = vpop.permute.xlu0 %410
    %412 = vrot.lane.b32.xlu0 %v38, 96
    %v413 = vpop.permute.xlu0 %412
    %414 = vrot.lane.b32.xlu0 %v39, 96
    %v415 = vpop.permute.xlu0 %414
    %v424 = vsel %vm64, %v32, %v353
    %v425 = vsel %vm64, %v33, %v355
    %v426 = vsel %vm64, %v34, %v357
    %v427 = vsel %vm64, %v35, %v359
    %v428 = vsel %vm64, %v36, %v361
    %v429 = vsel %vm64, %v37, %v363
    %v430 = vsel %vm64, %v38, %v365
    %v431 = vsel %vm64, %v39, %v367
    %vm432 = vcmask 523264
    %v433 = vsel %vm432, %v424, %v377
    %v434 = vsel %vm432, %v425, %v379
    %v435 = vsel %vm432, %v426, %v381
    %v436 = vsel %vm432, %v427, %v383
    %v437 = vsel %vm432, %v428, %v385
    %v438 = vsel %vm432, %v429, %v387
    %v439 = vsel %vm432, %v430, %v389
    %v440 = vsel %vm432, %v431, %v391
    %vm441 = vcmask 785408
    %v442 = vsel %vm441, %v433, %v401
    %v443 = vsel %vm441, %v434, %v403
    %v444 = vsel %vm441, %v435, %v405
    %v445 = vsel %vm441, %v436, %v407
    %v446 = vsel %vm441, %v437, %v409
    %v447 = vsel %vm441, %v438, %v411
    %v448 = vsel %vm441, %v439, %v413
    %v449 = vsel %vm441, %v440, %v415
    %v450 = vlaneseq
    %v451 = vshrl.u32 %v450, 7
    %v452 = vsub.s32 0, %v451
    %v453 = vrot.slane %v40, %v452
    %v454 = vmul.f32 %v442, %v453
    %v455 = vmul.f32 %v443, %v453
    %v456 = vmul.f32 %v444, %v453
    %v457 = vmul.f32 %v445, %v453
    %v458 = vmul.f32 %v446, %v453
    %v459 = vmul.f32 %v447, %v453
    %v460 = vmul.f32 %v448, %v453
    %v461 = vmul.f32 %v449, %v453
    %v462 = vmul.f32 %v454, %v306
    %v463 = vmul.f32 %v455, %v311
    %v464 = vmul.f32 %v456, %v316
    %v465 = vmul.f32 %v457, %v321
    %v466 = vmul.f32 %v458, %v326
    %v467 = vmul.f32 %v459, %v331
    %v468 = vmul.f32 %v460, %v336
    %v469 = vmul.f32 %v461, %v341
    %470 = vmatprep.subr.mxu0 0.0
    %471 = vmatpush1.xpose.msra.mxu0 %v462
    %472 = vmatprep.subr.mxu0 0.0
    %473 = vmatpush1.xpose.msra.mxu0 %v463
    %474 = vmatprep.subr.mxu0 0.0
    %475 = vmatpush1.xpose.msra.mxu0 %v464
    %476 = vmatprep.subr.mxu0 0.0
    %477 = vmatpush1.xpose.msra.mxu0 %v465
    %478 = vmatprep.subr.mxu0 0.0
    %479 = vmatpush1.xpose.msra.mxu0 %v466
    %480 = vmatprep.subr.mxu0 0.0
    %481 = vmatpush1.xpose.msra.mxu0 %v467
    %482 = vmatprep.subr.mxu0 0.0
    %483 = vmatpush1.xpose.msra.mxu0 %v468
    %484 = vmatprep.subr.mxu0 0.0
    %485 = vmatpush1.xpose.msra.mxu0 %v469
    %486 = vmatprep.subr.mxu0 0.0
    %487 = vmatpush1.xpose.msra.mxu0 0.0
    %488 = vmatprep.subr.mxu0 0.0
    %489 = vmatpush1.xpose.msra.mxu0 0.0
    %490 = vmatprep.subr.mxu0 0.0
    %491 = vmatpush1.xpose.msra.mxu0 0.0
    %492 = vmatprep.subr.mxu0 0.0
    %493 = vmatpush1.xpose.msra.mxu0 0.0
    %494 = vmatprep.subr.mxu0 0.0
    %495 = vmatpush1.xpose.msra.mxu0 0.0
    %496 = vmatprep.subr.mxu0 0.0
    %497 = vmatpush1.xpose.msra.mxu0 0.0
    %498 = vmatprep.subr.mxu0 0.0
    %499 = vmatpush1.xpose.msra.mxu0 0.0
    %500 = vmatprep.subr.mxu0 0.0
    %501 = vmatpush1.xpose.msra.mxu0 0.0
    %502 = vmatprep.subr.mxu0 0.0
    %503 = vmatpush1.xpose.msra.mxu0 0.0
    %504 = vmatprep.subr.mxu0 0.0
    %505 = vmatpush1.xpose.msra.mxu0 0.0
    %506 = vmatprep.subr.mxu0 0.0
    %507 = vmatpush1.xpose.msra.mxu0 0.0
    %508 = vmatprep.subr.mxu0 0.0
    %509 = vmatpush1.xpose.msra.mxu0 0.0
    %510 = vmatprep.subr.mxu0 0.0
    %511 = vmatpush1.xpose.msra.mxu0 0.0
    %512 = vmatprep.subr.mxu0 0.0
    %513 = vmatpush1.xpose.msra.mxu0 0.0
    %514 = vmatprep.subr.mxu0 0.0
    %515 = vmatpush1.xpose.msra.mxu0 0.0
    %516 = vmatprep.subr.mxu0 0.0
    %517 = vmatpush1.xpose.msra.mxu0 0.0
    %518 = vmatprep.subr.mxu0 0.0
    %519 = vmatpush1.xpose.msra.mxu0 0.0
    %520 = vmatprep.subr.mxu0 0.0
    %521 = vmatpush1.xpose.msra.mxu0 0.0
    %522 = vmatprep.subr.mxu0 0.0
    %523 = vmatpush1.xpose.msra.mxu0 0.0
    %524 = vmatprep.subr.mxu0 0.0
    %525 = vmatpush1.xpose.msra.mxu0 0.0
    %526 = vmatprep.subr.mxu0 0.0
    %527 = vmatpush1.xpose.msra.mxu0 0.0
    %528 = vmatprep.subr.mxu0 0.0
    %529 = vmatpush1.xpose.msra.mxu0 0.0
    %530 = vmatprep.subr.mxu0 0.0
    %531 = vmatpush1.xpose.msra.mxu0 0.0
    %532 = vmatprep.subr.mxu0 0.0
    %533 = vmatpush1.xpose.msra.mxu0 0.0
    %534 = vmatprep.mubr.f32.mxu0 0.0
    %535 = vmatmul.mubr.f32.gmra.mrb[0].mxu0 %v462
    %v536 = vpop.f32.mrb[0].mxu0
    %v537 = vadd.f32 0.0, %v536
    %v538 = vpop.f32.mrb[0].mxu0
    %539 = vmatprep.mubr.f32.mxu0 0.0
    %540 = vmatmul.mubr.f32.gmra.mrb[0].mxu0 %v463
    %v541 = vpop.f32.mrb[0].mxu0
    %v542 = vadd.f32 0.0, %v541
    %v543 = vpop.f32.mrb[0].mxu0
    %544 = vmatprep.mubr.f32.mxu0 0.0
    %545 = vmatmul.mubr.f32.gmra.mrb[0].mxu0 %v464
    %v546 = vpop.f32.mrb[0].mxu0
    %v547 = vadd.f32 0.0, %v546
    %v548 = vpop.f32.mrb[0].mxu0
    %549 = vmatprep.mubr.f32.mxu0 0.0
    %550 = vmatmul.mubr.f32.gmra.mrb[0].mxu0 %v465
    %v551 = vpop.f32.mrb[0].mxu0
    %v552 = vadd.f32 0.0, %v551
    %v553 = vpop.f32.mrb[0].mxu0
    %554 = vmatprep.mubr.f32.mxu0 0.0
    %555 = vmatmul.mubr.f32.gmra.mrb[0].mxu0 %v466
    %v556 = vpop.f32.mrb[0].mxu0
    %v557 = vadd.f32 0.0, %v556
    %v558 = vpop.f32.mrb[0].mxu0
    %559 = vmatprep.mubr.f32.mxu0 0.0
    %560 = vmatmul.mubr.f32.gmra.mrb[0].mxu0 %v467
    %v561 = vpop.f32.mrb[0].mxu0
    %v562 = vadd.f32 0.0, %v561
    %v563 = vpop.f32.mrb[0].mxu0
    %564 = vmatprep.mubr.f32.mxu0 0.0
    %565 = vmatmul.mubr.f32.gmra.mrb[0].mxu0 %v468
    %v566 = vpop.f32.mrb[0].mxu0
    %v567 = vadd.f32 0.0, %v566
    %v568 = vpop.f32.mrb[0].mxu0
    %569 = vmatprep.mubr.f32.mxu0 0.0
    %570 = vmatmul.mubr.f32.gmra.mrb[0].mxu0 %v469
    %v571 = vpop.f32.mrb[0].mxu0
    %v572 = vadd.f32 0.0, %v571
    %v573 = vpop.f32.mrb[0].mxu0
    %574 = vdwg.mxu0
    %v575 = vmul.f32 %v537, 0.25
    %v576 = vmul.f32 %v542, 0.25
    %v577 = vmul.f32 %v547, 0.25
    %v578 = vmul.f32 %v552, 0.25
    %v579 = vmul.f32 %v557, 0.25
    %v580 = vmul.f32 %v562, 0.25
    %v581 = vmul.f32 %v567, 0.25
    %v582 = vmul.f32 %v572, 0.25
    %vm583 = vcmp.lt.f32.partialorder %v575, 0.1
    %vm584 = vcmp.lt.f32.partialorder %v576, 0.1
    %vm585 = vcmp.lt.f32.partialorder %v577, 0.1
    %vm586 = vcmp.lt.f32.partialorder %v578, 0.1
    %vm587 = vcmp.lt.f32.partialorder %v579, 0.1
    %vm588 = vcmp.lt.f32.partialorder %v580, 0.1
    %vm589 = vcmp.lt.f32.partialorder %v581, 0.1
    %vm590 = vcmp.lt.f32.partialorder %v582, 0.1
    %v591 = vsel %vm583, 0.0, %v575
    %v592 = vsel %vm584, 0.0, %v576
    %v593 = vsel %vm585, 0.0, %v577
    %v594 = vsel %vm586, 0.0, %v578
    %v595 = vsel %vm587, 0.0, %v579
    %v596 = vsel %vm588, 0.0, %v580
    %v597 = vsel %vm589, 0.0, %v581
    %v598 = vsel %vm590, 0.0, %v582
    %v599 = vsel %vm432, %v591, 0.0
    %600 = vadd.xlane.f32.xlu0 %v599
    %v601 = vpop.xlane.xlu0 %600
    %v602 = vsel %vm432, %v592, 0.0
    %603 = vadd.xlane.f32.xlu0 %v602
    %v604 = vpop.xlane.xlu0 %603
    %v605 = vsel %vm432, %v593, 0.0
    %606 = vadd.xlane.f32.xlu0 %v605
    %v607 = vpop.xlane.xlu0 %606
    %v608 = vsel %vm432, %v594, 0.0
    %609 = vadd.xlane.f32.xlu0 %v608
    %v610 = vpop.xlane.xlu0 %609
    %v611 = vsel %vm432, %v595, 0.0
    %612 = vadd.xlane.f32.xlu0 %v611
    %v613 = vpop.xlane.xlu0 %612
    %v614 = vsel %vm432, %v596, 0.0
    %615 = vadd.xlane.f32.xlu0 %v614
    %v616 = vpop.xlane.xlu0 %615
    %v617 = vsel %vm432, %v597, 0.0
    %618 = vadd.xlane.f32.xlu0 %v617
    %v619 = vpop.xlane.xlu0 %618
    %v620 = vsel %vm432, %v598, 0.0
    %621 = vadd.xlane.f32.xlu0 %v620
    %v622 = vpop.xlane.xlu0 %621
    %v623 = vmax.f32 %v601, 1e-12
    %v624 = vmax.f32 %v604, 1e-12
    %v625 = vmax.f32 %v607, 1e-12
    %v626 = vmax.f32 %v610, 1e-12
    %v627 = vmax.f32 %v613, 1e-12
    %v628 = vmax.f32 %v616, 1e-12
    %v629 = vmax.f32 %v619, 1e-12
    %v630 = vmax.f32 %v622, 1e-12
    %v631 = vrcp.pop %v623
    %v632 = vrcp.pop %v624
    %v633 = vrcp.pop %v625
    %v634 = vrcp.pop %v626
    %v635 = vrcp.pop %v627
    %v636 = vrcp.pop %v628
    %v637 = vrcp.pop %v629
    %v638 = vrcp.pop %v630
    %v639 = vmul.f32 %v591, %v631
    %v640 = vmul.f32 %v592, %v632
    %v641 = vmul.f32 %v593, %v633
    %v642 = vmul.f32 %v594, %v634
    %v643 = vmul.f32 %v595, %v635
    %v644 = vmul.f32 %v596, %v636
    %v645 = vmul.f32 %v597, %v637
    %v646 = vmul.f32 %v598, %v638
    %v647 = vmul.f32 %v639, 0.2
    %v648 = vmul.f32 %v640, 0.2
    %v649 = vmul.f32 %v641, 0.2
    %v650 = vmul.f32 %v642, 0.2
    %v651 = vmul.f32 %v643, 0.2
    %v652 = vmul.f32 %v644, 0.2
    %v653 = vmul.f32 %v645, 0.2
    %v654 = vmul.f32 %v646, 0.2
    %v655 = vld [vmem:[%s2] sm:$0xff]
    %v656 = vld [vmem:[%s2 + $0x8] sm:$0xff]
    %v657 = vld [vmem:[%s2 + $0x10] sm:$0xff]
    %v658 = vld [vmem:[%s2 + $0x18] sm:$0xff]
    %v659 = vld [vmem:[%s2 + $0x20] sm:$0xff]
    %v660 = vld [vmem:[%s2 + $0x28] sm:$0xff]
    %v661 = vld [vmem:[%s2 + $0x30] sm:$0xff]
    %v662 = vld [vmem:[%s2 + $0x38] sm:$0xff]
    %v663 = vmul.f32 %v655, 0.8
    %v664 = vmul.f32 %v656, 0.8
    %v665 = vmul.f32 %v657, 0.8
    %v666 = vmul.f32 %v658, 0.8
    %v667 = vmul.f32 %v659, 0.8
    %v668 = vmul.f32 %v660, 0.8
    %v669 = vmul.f32 %v661, 0.8
    %v670 = vmul.f32 %v662, 0.8
    %v671 = vadd.f32 %v647, %v663
    %v672 = vadd.f32 %v648, %v664
    %v673 = vadd.f32 %v649, %v665
    %v674 = vadd.f32 %v650, %v666
    %v675 = vadd.f32 %v651, %v667
    %v676 = vadd.f32 %v652, %v668
    %v677 = vadd.f32 %v653, %v669
    %v678 = vadd.f32 %v654, %v670
    %v679 = vsel %vm64, %v32, 0
    %v681 = vsel %vm64, %v33, 0
    %v683 = vsel %vm64, %v34, 0
    %v685 = vsel %vm64, %v35, 0
    %v687 = vsel %vm64, %v36, 0
    %v689 = vsel %vm64, %v37, 0
    %v691 = vsel %vm64, %v38, 0
    %v693 = vsel %vm64, %v39, 0
    %695 = vmatprep.subr.mxu0 0.0
    %696 = vmatpush1.msra.mxu0 %v46
    %697 = vmatprep.subr.mxu0 0.0
    %698 = vmatpush1.msra.mxu0 %v47
    %699 = vmatprep.subr.mxu0 0.0
    %700 = vmatpush1.msra.mxu0 %v48
    %701 = vmatprep.subr.mxu0 0.0
    %702 = vmatpush1.msra.mxu0 %v49
    %703 = vmatprep.subr.mxu0 0.0
    %704 = vmatpush1.msra.mxu0 0.0
    %705 = vmatprep.subr.mxu0 0.0
    %706 = vmatpush1.msra.mxu0 0.0
    %707 = vmatprep.subr.mxu0 0.0
    %708 = vmatpush1.msra.mxu0 0.0
    %709 = vmatprep.subr.mxu0 0.0
    %710 = vmatpush1.msra.mxu0 0.0
    %711 = vmatprep.subr.mxu0 0.0
    %712 = vmatpush1.msra.mxu0 0.0
    %713 = vmatprep.subr.mxu0 0.0
    %714 = vmatpush1.msra.mxu0 0.0
    %715 = vmatprep.subr.mxu0 0.0
    %716 = vmatpush1.msra.mxu0 0.0
    %717 = vmatprep.subr.mxu0 0.0
    %718 = vmatpush1.msra.mxu0 0.0
    %719 = vmatprep.subr.mxu0 0.0
    %720 = vmatpush1.msra.mxu0 0.0
    %721 = vmatprep.subr.mxu0 0.0
    %722 = vmatpush1.msra.mxu0 0.0
    %723 = vmatprep.subr.mxu0 0.0
    %724 = vmatpush1.msra.mxu0 0.0
    %725 = vmatprep.subr.mxu0 0.0
    %726 = vmatpush1.msra.mxu0 0.0
    %727 = vmatprep.subr.mxu0 0.0
    %728 = vmatpush1.msra.mxu0 0.0
    %729 = vmatprep.subr.mxu0 0.0
    %730 = vmatpush1.msra.mxu0 0.0
    %731 = vmatprep.subr.mxu0 0.0
    %732 = vmatpush1.msra.mxu0 0.0
    %733 = vmatprep.subr.mxu0 0.0
    %734 = vmatpush1.msra.mxu0 0.0
    %735 = vmatprep.subr.mxu0 0.0
    %736 = vmatpush1.msra.mxu0 0.0
    %737 = vmatprep.subr.mxu0 0.0
    %738 = vmatpush1.msra.mxu0 0.0
    %739 = vmatprep.subr.mxu0 0.0
    %740 = vmatpush1.msra.mxu0 0.0
    %741 = vmatprep.subr.mxu0 0.0
    %742 = vmatpush1.msra.mxu0 0.0
    %743 = vmatprep.subr.mxu0 0.0
    %744 = vmatpush1.msra.mxu0 0.0
    %745 = vmatprep.subr.mxu0 0.0
    %746 = vmatpush1.msra.mxu0 0.0
    %747 = vmatprep.subr.mxu0 0.0
    %748 = vmatpush1.msra.mxu0 0.0
    %749 = vmatprep.subr.mxu0 0.0
    %750 = vmatpush1.msra.mxu0 0.0
    %751 = vmatprep.subr.mxu0 0.0
    %752 = vmatpush1.msra.mxu0 0.0
    %753 = vmatprep.subr.mxu0 0.0
    %754 = vmatpush1.msra.mxu0 0.0
    %755 = vmatprep.subr.mxu0 0.0
    %756 = vmatpush1.msra.mxu0 0.0
    %757 = vmatprep.subr.mxu0 0.0
    %758 = vmatpush1.msra.mxu0 0.0
    %759 = vmatprep.mubr.f32.mxu0 0.0
    %760 = vmatmul.mubr.f32.gmra.mrb[0].mxu0 %v679
    %v761 = vpop.f32.mrb[0].mxu0
    %v762 = vadd.f32 0.0, %v761
    %v763 = vpop.f32.mrb[0].mxu0
    %764 = vmatprep.mubr.f32.mxu0 0.0
    %765 = vmatmul.mubr.f32.gmra.mrb[0].mxu0 %v681
    %v766 = vpop.f32.mrb[0].mxu0
    %v767 = vadd.f32 0.0, %v766
    %v768 = vpop.f32.mrb[0].mxu0
    %769 = vmatprep.mubr.f32.mxu0 0.0
    %770 = vmatmul.mubr.f32.gmra.mrb[0].mxu0 %v683
    %v771 = vpop.f32.mrb[0].mxu0
    %v772 = vadd.f32 0.0, %v771
    %v773 = vpop.f32.mrb[0].mxu0
    %774 = vmatprep.mubr.f32.mxu0 0.0
    %775 = vmatmul.mubr.f32.gmra.mrb[0].mxu0 %v685
    %v776 = vpop.f32.mrb[0].mxu0
    %v777 = vadd.f32 0.0, %v776
    %v778 = vpop.f32.mrb[0].mxu0
    %779 = vmatprep.mubr.f32.mxu0 0.0
    %780 = vmatmul.mubr.f32.gmra.mrb[0].mxu0 %v687
    %v781 = vpop.f32.mrb[0].mxu0
    %v782 = vadd.f32 0.0, %v781
    %v783 = vpop.f32.mrb[0].mxu0
    %784 = vmatprep.mubr.f32.mxu0 0.0
    %785 = vmatmul.mubr.f32.gmra.mrb[0].mxu0 %v689
    %v786 = vpop.f32.mrb[0].mxu0
    %v787 = vadd.f32 0.0, %v786
    %v788 = vpop.f32.mrb[0].mxu0
    %789 = vmatprep.mubr.f32.mxu0 0.0
    %790 = vmatmul.mubr.f32.gmra.mrb[0].mxu0 %v691
    %v791 = vpop.f32.mrb[0].mxu0
    %v792 = vadd.f32 0.0, %v791
    %v793 = vpop.f32.mrb[0].mxu0
    %794 = vmatprep.mubr.f32.mxu0 0.0
    %795 = vmatmul.mubr.f32.gmra.mrb[0].mxu0 %v693
    %v796 = vpop.f32.mrb[0].mxu0
    %v797 = vadd.f32 0.0, %v796
    %v798 = vpop.f32.mrb[0].mxu0
    %799 = vdwg.mxu0
    %v800 = vlaneseq
    %v801 = vshrl.u32 %v800, 7
    %v802 = vsub.s32 0, %v801
    %v803 = vrot.slane %v50, %v802
    %v805 = vsel %vm432, %v671, 0
    %v808 = vsel %vm432, %v672, 0
    %v811 = vsel %vm432, %v673, 0
    %v814 = vsel %vm432, %v674, 0
    %v817 = vsel %vm432, %v675, 0
    %v820 = vsel %vm432, %v676, 0
    %v823 = vsel %vm432, %v677, 0
    %v826 = vsel %vm432, %v678, 0
    %828 = vmatprep.subr.mxu0 0.0
    %829 = vmatpush1.msra.mxu0 %v762
    %830 = vmatprep.subr.mxu0 0.0
    %831 = vmatpush1.msra.mxu0 %v767
    %832 = vmatprep.subr.mxu0 0.0
    %833 = vmatpush1.msra.mxu0 %v772
    %834 = vmatprep.subr.mxu0 0.0
    %835 = vmatpush1.msra.mxu0 %v777
    %836 = vmatprep.subr.mxu0 0.0
    %837 = vmatpush1.msra.mxu0 %v782
    %838 = vmatprep.subr.mxu0 0.0
    %839 = vmatpush1.msra.mxu0 %v787
    %840 = vmatprep.subr.mxu0 0.0
    %841 = vmatpush1.msra.mxu0 %v792
    %842 = vmatprep.subr.mxu0 0.0
    %843 = vmatpush1.msra.mxu0 %v797
    %844 = vmatprep.subr.mxu0 0.0
    %845 = vmatpush1.msra.mxu0 0.0
    %846 = vmatprep.subr.mxu0 0.0
    %847 = vmatpush1.msra.mxu0 0.0
    %848 = vmatprep.subr.mxu0 0.0
    %849 = vmatpush1.msra.mxu0 0.0
    %850 = vmatprep.subr.mxu0 0.0
    %851 = vmatpush1.msra.mxu0 0.0
    %852 = vmatprep.subr.mxu0 0.0
    %853 = vmatpush1.msra.mxu0 0.0
    %854 = vmatprep.subr.mxu0 0.0
    %855 = vmatpush1.msra.mxu0 0.0
    %856 = vmatprep.subr.mxu0 0.0
    %857 = vmatpush1.msra.mxu0 0.0
    %858 = vmatprep.subr.mxu0 0.0
    %859 = vmatpush1.msra.mxu0 0.0
    %860 = vmatprep.subr.mxu0 0.0
    %861 = vmatpush1.msra.mxu0 0.0
    %862 = vmatprep.subr.mxu0 0.0
    %863 = vmatpush1.msra.mxu0 0.0
    %864 = vmatprep.subr.mxu0 0.0
    %865 = vmatpush1.msra.mxu0 0.0
    %866 = vmatprep.subr.mxu0 0.0
    %867 = vmatpush1.msra.mxu0 0.0
    %868 = vmatprep.subr.mxu0 0.0
    %869 = vmatpush1.msra.mxu0 0.0
    %870 = vmatprep.subr.mxu0 0.0
    %871 = vmatpush1.msra.mxu0 0.0
    %872 = vmatprep.subr.mxu0 0.0
    %873 = vmatpush1.msra.mxu0 0.0
    %874 = vmatprep.subr.mxu0 0.0
    %875 = vmatpush1.msra.mxu0 0.0
    %876 = vmatprep.subr.mxu0 0.0
    %877 = vmatpush1.msra.mxu0 0.0
    %878 = vmatprep.subr.mxu0 0.0
    %879 = vmatpush1.msra.mxu0 0.0
    %880 = vmatprep.subr.mxu0 0.0
    %881 = vmatpush1.msra.mxu0 0.0
    %882 = vmatprep.subr.mxu0 0.0
    %883 = vmatpush1.msra.mxu0 0.0
    %884 = vmatprep.subr.mxu0 0.0
    %885 = vmatpush1.msra.mxu0 0.0
    %886 = vmatprep.subr.mxu0 0.0
    %887 = vmatpush1.msra.mxu0 0.0
    %888 = vmatprep.subr.mxu0 0.0
    %889 = vmatpush1.msra.mxu0 0.0
    %890 = vmatprep.subr.mxu0 0.0
    %891 = vmatpush1.msra.mxu0 0.0
    %892 = vmatprep.mubr.f32.mxu0 0.0
    %893 = vmatmul.mubr.f32.gmra.mrb[0].mxu0 %v805
    %v894 = vpop.f32.mrb[0].mxu0
    %v895 = vadd.f32 %v803, %v894
    %v896 = vpop.f32.mrb[0].mxu0
    %897 = vmatprep.mubr.f32.mxu0 0.0
    %898 = vmatmul.mubr.f32.gmra.mrb[0].mxu0 %v808
    %v899 = vpop.f32.mrb[0].mxu0
    %v900 = vadd.f32 %v803, %v899
    %v901 = vpop.f32.mrb[0].mxu0
    %902 = vmatprep.mubr.f32.mxu0 0.0
    %903 = vmatmul.mubr.f32.gmra.mrb[0].mxu0 %v811
    %v904 = vpop.f32.mrb[0].mxu0
    %v905 = vadd.f32 %v803, %v904
    %v906 = vpop.f32.mrb[0].mxu0
    %907 = vmatprep.mubr.f32.mxu0 0.0
    %908 = vmatmul.mubr.f32.gmra.mrb[0].mxu0 %v814
    %v909 = vpop.f32.mrb[0].mxu0
    %v910 = vadd.f32 %v803, %v909
    %v911 = vpop.f32.mrb[0].mxu0
    %912 = vmatprep.mubr.f32.mxu0 0.0
    %913 = vmatmul.mubr.f32.gmra.mrb[0].mxu0 %v817
    %v914 = vpop.f32.mrb[0].mxu0
    %v915 = vadd.f32 %v803, %v914
    %v916 = vpop.f32.mrb[0].mxu0
    %917 = vmatprep.mubr.f32.mxu0 0.0
    %918 = vmatmul.mubr.f32.gmra.mrb[0].mxu0 %v820
    %v919 = vpop.f32.mrb[0].mxu0
    %v920 = vadd.f32 %v803, %v919
    %v921 = vpop.f32.mrb[0].mxu0
    %922 = vmatprep.mubr.f32.mxu0 0.0
    %923 = vmatmul.mubr.f32.gmra.mrb[0].mxu0 %v823
    %v924 = vpop.f32.mrb[0].mxu0
    %v925 = vadd.f32 %v803, %v924
    %v926 = vpop.f32.mrb[0].mxu0
    %927 = vmatprep.mubr.f32.mxu0 0.0
    %928 = vmatmul.mubr.f32.gmra.mrb[0].mxu0 %v826
    %v929 = vpop.f32.mrb[0].mxu0
    %v930 = vadd.f32 %v803, %v929
    %v931 = vpop.f32.mrb[0].mxu0
    %932 = vdwg.mxu0
    %v933 = vmax.f32 %v895, 0.0
    %v934 = vmax.f32 %v900, 0.0
    %v935 = vmax.f32 %v905, 0.0
    %v936 = vmax.f32 %v910, 0.0
    %v937 = vmax.f32 %v915, 0.0
    %v938 = vmax.f32 %v920, 0.0
    %v939 = vmax.f32 %v925, 0.0
    %v940 = vmax.f32 %v930, 0.0
    %v942 = vsel %vm64, %v933, 0
    %v945 = vsel %vm64, %v934, 0
    %v948 = vsel %vm64, %v935, 0
    %v951 = vsel %vm64, %v936, 0
    %v954 = vsel %vm64, %v937, 0
    %v957 = vsel %vm64, %v938, 0
    %v960 = vsel %vm64, %v939, 0
    %v963 = vsel %vm64, %v940, 0
    %965 = vmatprep.subr.mxu0 0.0
    %966 = vmatpush1.msra.mxu0 %v51
    %967 = vmatprep.subr.mxu0 0.0
    %968 = vmatpush1.msra.mxu0 %v52
    %969 = vmatprep.subr.mxu0 0.0
    %970 = vmatpush1.msra.mxu0 %v53
    %971 = vmatprep.subr.mxu0 0.0
    %972 = vmatpush1.msra.mxu0 %v54
    %973 = vmatprep.subr.mxu0 0.0
    %974 = vmatpush1.msra.mxu0 0.0
    %975 = vmatprep.subr.mxu0 0.0
    %976 = vmatpush1.msra.mxu0 0.0
    %977 = vmatprep.subr.mxu0 0.0
    %978 = vmatpush1.msra.mxu0 0.0
    %979 = vmatprep.subr.mxu0 0.0
    %980 = vmatpush1.msra.mxu0 0.0
    %981 = vmatprep.subr.mxu0 0.0
    %982 = vmatpush1.msra.mxu0 0.0
    %983 = vmatprep.subr.mxu0 0.0
    %984 = vmatpush1.msra.mxu0 0.0
    %985 = vmatprep.subr.mxu0 0.0
    %986 = vmatpush1.msra.mxu0 0.0
    %987 = vmatprep.subr.mxu0 0.0
    %988 = vmatpush1.msra.mxu0 0.0
    %989 = vmatprep.subr.mxu0 0.0
    %990 = vmatpush1.msra.mxu0 0.0
    %991 = vmatprep.subr.mxu0 0.0
    %992 = vmatpush1.msra.mxu0 0.0
    %993 = vmatprep.subr.mxu0 0.0
    %994 = vmatpush1.msra.mxu0 0.0
    %995 = vmatprep.subr.mxu0 0.0
    %996 = vmatpush1.msra.mxu0 0.0
    %997 = vmatprep.subr.mxu0 0.0
    %998 = vmatpush1.msra.mxu0 0.0
    %999 = vmatprep.subr.mxu0 0.0
    %1000 = vmatpush1.msra.mxu0 0.0
    %1001 = vmatprep.subr.mxu0 0.0
    %1002 = vmatpush1.msra.mxu0 0.0
    %1003 = vmatprep.subr.mxu0 0.0
    %1004 = vmatpush1.msra.mxu0 0.0
    %1005 = vmatprep.subr.mxu0 0.0
    %1006 = vmatpush1.msra.mxu0 0.0
    %1007 = vmatprep.subr.mxu0 0.0
    %1008 = vmatpush1.msra.mxu0 0.0
    %1009 = vmatprep.subr.mxu0 0.0
    %1010 = vmatpush1.msra.mxu0 0.0
    %1011 = vmatprep.subr.mxu0 0.0
    %1012 = vmatpush1.msra.mxu0 0.0
    %1013 = vmatprep.subr.mxu0 0.0
    %1014 = vmatpush1.msra.mxu0 0.0
    %1015 = vmatprep.subr.mxu0 0.0
    %1016 = vmatpush1.msra.mxu0 0.0
    %1017 = vmatprep.subr.mxu0 0.0
    %1018 = vmatpush1.msra.mxu0 0.0
    %1019 = vmatprep.subr.mxu0 0.0
    %1020 = vmatpush1.msra.mxu0 0.0
    %1021 = vmatprep.subr.mxu0 0.0
    %1022 = vmatpush1.msra.mxu0 0.0
    %1023 = vmatprep.subr.mxu0 0.0
    %1024 = vmatpush1.msra.mxu0 0.0
    %1025 = vmatprep.subr.mxu0 0.0
    %1026 = vmatpush1.msra.mxu0 0.0
    %1027 = vmatprep.subr.mxu0 0.0
    %1028 = vmatpush1.msra.mxu0 0.0
    %1029 = vmatprep.mubr.f32.mxu0 0.0
    %1030 = vmatmul.mubr.f32.gmra.mrb[0].mxu0 %v942
    %v1031 = vpop.f32.mrb[0].mxu0
    %v1032 = vadd.f32 0.0, %v1031
    %v1033 = vpop.f32.mrb[0].mxu0
    %1034 = vmatprep.mubr.f32.mxu0 0.0
    %1035 = vmatmul.mubr.f32.gmra.mrb[0].mxu0 %v945
    %v1036 = vpop.f32.mrb[0].mxu0
    %v1037 = vadd.f32 0.0, %v1036
    %v1038 = vpop.f32.mrb[0].mxu0
    %1039 = vmatprep.mubr.f32.mxu0 0.0
    %1040 = vmatmul.mubr.f32.gmra.mrb[0].mxu0 %v948
    %v1041 = vpop.f32.mrb[0].mxu0
    %v1042 = vadd.f32 0.0, %v1041
    %v1043 = vpop.f32.mrb[0].mxu0
    %1044 = vmatprep.mubr.f32.mxu0 0.0
    %1045 = vmatmul.mubr.f32.gmra.mrb[0].mxu0 %v951
    %v1046 = vpop.f32.mrb[0].mxu0
    %v1047 = vadd.f32 0.0, %v1046
    %v1048 = vpop.f32.mrb[0].mxu0
    %1049 = vmatprep.mubr.f32.mxu0 0.0
    %1050 = vmatmul.mubr.f32.gmra.mrb[0].mxu0 %v954
    %v1051 = vpop.f32.mrb[0].mxu0
    %v1052 = vadd.f32 0.0, %v1051
    %v1053 = vpop.f32.mrb[0].mxu0
    %1054 = vmatprep.mubr.f32.mxu0 0.0
    %1055 = vmatmul.mubr.f32.gmra.mrb[0].mxu0 %v957
    %v1056 = vpop.f32.mrb[0].mxu0
    %v1057 = vadd.f32 0.0, %v1056
    %v1058 = vpop.f32.mrb[0].mxu0
    %1059 = vmatprep.mubr.f32.mxu0 0.0
    %1060 = vmatmul.mubr.f32.gmra.mrb[0].mxu0 %v960
    %v1061 = vpop.f32.mrb[0].mxu0
    %v1062 = vadd.f32 0.0, %v1061
    %v1063 = vpop.f32.mrb[0].mxu0
    %1064 = vmatprep.mubr.f32.mxu0 0.0
    %1065 = vmatmul.mubr.f32.gmra.mrb[0].mxu0 %v963
    %v1066 = vpop.f32.mrb[0].mxu0
    %v1067 = vadd.f32 0.0, %v1066
    %v1068 = vpop.f32.mrb[0].mxu0
    %1069 = vdwg.mxu0
    %v1070 = vlaneseq
    %v1071 = vshrl.u32 %v1070, 7
    %v1072 = vsub.s32 0, %v1071
    %v1073 = vrot.slane %v55, %v1072
    %1074 = vmatprep.subr.mxu0 0.0
    %1075 = vmatpush1.msra.mxu0 %v1032
    %1076 = vmatprep.subr.mxu0 0.0
    %1077 = vmatpush1.msra.mxu0 %v1037
    %1078 = vmatprep.subr.mxu0 0.0
    %1079 = vmatpush1.msra.mxu0 %v1042
    %1080 = vmatprep.subr.mxu0 0.0
    %1081 = vmatpush1.msra.mxu0 %v1047
    %1082 = vmatprep.subr.mxu0 0.0
    %1083 = vmatpush1.msra.mxu0 %v1052
    %1084 = vmatprep.subr.mxu0 0.0
    %1085 = vmatpush1.msra.mxu0 %v1057
    %1086 = vmatprep.subr.mxu0 0.0
    %1087 = vmatpush1.msra.mxu0 %v1062
    %1088 = vmatprep.subr.mxu0 0.0
    %1089 = vmatpush1.msra.mxu0 %v1067
    %1090 = vmatprep.subr.mxu0 0.0
    %1091 = vmatpush1.msra.mxu0 0.0
    %1092 = vmatprep.subr.mxu0 0.0
    %1093 = vmatpush1.msra.mxu0 0.0
    %1094 = vmatprep.subr.mxu0 0.0
    %1095 = vmatpush1.msra.mxu0 0.0
    %1096 = vmatprep.subr.mxu0 0.0
    %1097 = vmatpush1.msra.mxu0 0.0
    %1098 = vmatprep.subr.mxu0 0.0
    %1099 = vmatpush1.msra.mxu0 0.0
    %1100 = vmatprep.subr.mxu0 0.0
    %1101 = vmatpush1.msra.mxu0 0.0
    %1102 = vmatprep.subr.mxu0 0.0
    %1103 = vmatpush1.msra.mxu0 0.0
    %1104 = vmatprep.subr.mxu0 0.0
    %1105 = vmatpush1.msra.mxu0 0.0
    %1106 = vmatprep.subr.mxu0 0.0
    %1107 = vmatpush1.msra.mxu0 0.0
    %1108 = vmatprep.subr.mxu0 0.0
    %1109 = vmatpush1.msra.mxu0 0.0
    %1110 = vmatprep.subr.mxu0 0.0
    %1111 = vmatpush1.msra.mxu0 0.0
    %1112 = vmatprep.subr.mxu0 0.0
    %1113 = vmatpush1.msra.mxu0 0.0
    %1114 = vmatprep.subr.mxu0 0.0
    %1115 = vmatpush1.msra.mxu0 0.0
    %1116 = vmatprep.subr.mxu0 0.0
    %1117 = vmatpush1.msra.mxu0 0.0
    %1118 = vmatprep.subr.mxu0 0.0
    %1119 = vmatpush1.msra.mxu0 0.0
    %1120 = vmatprep.subr.mxu0 0.0
    %1121 = vmatpush1.msra.mxu0 0.0
    %1122 = vmatprep.subr.mxu0 0.0
    %1123 = vmatpush1.msra.mxu0 0.0
    %1124 = vmatprep.subr.mxu0 0.0
    %1125 = vmatpush1.msra.mxu0 0.0
    %1126 = vmatprep.subr.mxu0 0.0
    %1127 = vmatpush1.msra.mxu0 0.0
    %1128 = vmatprep.subr.mxu0 0.0
    %1129 = vmatpush1.msra.mxu0 0.0
    %1130 = vmatprep.subr.mxu0 0.0
    %1131 = vmatpush1.msra.mxu0 0.0
    %1132 = vmatprep.subr.mxu0 0.0
    %1133 = vmatpush1.msra.mxu0 0.0
    %1134 = vmatprep.subr.mxu0 0.0
    %1135 = vmatpush1.msra.mxu0 0.0
    %1136 = vmatprep.subr.mxu0 0.0
    %1137 = vmatpush1.msra.mxu0 0.0
    %1138 = vmatprep.mubr.f32.mxu0 0.0
    %1139 = vmatmul.mubr.f32.gmra.mrb[0].mxu0 %v805
    %v1140 = vpop.f32.mrb[0].mxu0
    %v1141 = vadd.f32 %v1073, %v1140
    %v1142 = vpop.f32.mrb[0].mxu0
    %1143 = vmatprep.mubr.f32.mxu0 0.0
    %1144 = vmatmul.mubr.f32.gmra.mrb[0].mxu0 %v808
    %v1145 = vpop.f32.mrb[0].mxu0
    %v1146 = vadd.f32 %v1073, %v1145
    %v1147 = vpop.f32.mrb[0].mxu0
    %1148 = vmatprep.mubr.f32.mxu0 0.0
    %1149 = vmatmul.mubr.f32.gmra.mrb[0].mxu0 %v811
    %v1150 = vpop.f32.mrb[0].mxu0
    %v1151 = vadd.f32 %v1073, %v1150
    %v1152 = vpop.f32.mrb[0].mxu0
    %1153 = vmatprep.mubr.f32.mxu0 0.0
    %1154 = vmatmul.mubr.f32.gmra.mrb[0].mxu0 %v814
    %v1155 = vpop.f32.mrb[0].mxu0
    %v1156 = vadd.f32 %v1073, %v1155
    %v1157 = vpop.f32.mrb[0].mxu0
    %1158 = vmatprep.mubr.f32.mxu0 0.0
    %1159 = vmatmul.mubr.f32.gmra.mrb[0].mxu0 %v817
    %v1160 = vpop.f32.mrb[0].mxu0
    %v1161 = vadd.f32 %v1073, %v1160
    %v1162 = vpop.f32.mrb[0].mxu0
    %1163 = vmatprep.mubr.f32.mxu0 0.0
    %1164 = vmatmul.mubr.f32.gmra.mrb[0].mxu0 %v820
    %v1165 = vpop.f32.mrb[0].mxu0
    %v1166 = vadd.f32 %v1073, %v1165
    %v1167 = vpop.f32.mrb[0].mxu0
    %1168 = vmatprep.mubr.f32.mxu0 0.0
    %1169 = vmatmul.mubr.f32.gmra.mrb[0].mxu0 %v823
    %v1170 = vpop.f32.mrb[0].mxu0
    %v1171 = vadd.f32 %v1073, %v1170
    %v1172 = vpop.f32.mrb[0].mxu0
    %1173 = vmatprep.mubr.f32.mxu0 0.0
    %1174 = vmatmul.mubr.f32.gmra.mrb[0].mxu0 %v826
    %v1175 = vpop.f32.mrb[0].mxu0
    %v1176 = vadd.f32 %v1073, %v1175
    %v1177 = vpop.f32.mrb[0].mxu0
    %1178 = vdwg.mxu0
    %1179 = vmax.xlane.f32.xlu0 %v1141
    %v1180 = vpop.xlane.xlu0 %1179
    %1181 = vmax.xlane.f32.xlu0 %v1146
    %v1182 = vpop.xlane.xlu0 %1181
    %1183 = vmax.xlane.f32.xlu0 %v1151
    %v1184 = vpop.xlane.xlu0 %1183
    %1185 = vmax.xlane.f32.xlu0 %v1156
    %v1186 = vpop.xlane.xlu0 %1185
    %1187 = vmax.xlane.f32.xlu0 %v1161
    %v1188 = vpop.xlane.xlu0 %1187
    %1189 = vmax.xlane.f32.xlu0 %v1166
    %v1190 = vpop.xlane.xlu0 %1189
    %1191 = vmax.xlane.f32.xlu0 %v1171
    %v1192 = vpop.xlane.xlu0 %1191
    %1193 = vmax.xlane.f32.xlu0 %v1176
    %v1194 = vpop.xlane.xlu0 %1193
    %v1195 = vsub.f32 %v1141, %v1180
    %v1196 = vsub.f32 %v1146, %v1182
    %v1197 = vsub.f32 %v1151, %v1184
    %v1198 = vsub.f32 %v1156, %v1186
    %v1199 = vsub.f32 %v1161, %v1188
    %v1200 = vsub.f32 %v1166, %v1190
    %v1201 = vsub.f32 %v1171, %v1192
    %v1202 = vsub.f32 %v1176, %v1194
    %v1203 = vmul.f32 %v1195, 1.442695
    %v1204 = vpow.pop %v1203
    %v1205 = vmul.f32 %v1196, 1.442695
    %v1206 = vpow.pop %v1205
    %v1207 = vmul.f32 %v1197, 1.442695
    %v1208 = vpow.pop %v1207
    %v1209 = vmul.f32 %v1198, 1.442695
    %v1210 = vpow.pop %v1209
    %v1211 = vmul.f32 %v1199, 1.442695
    %v1212 = vpow.pop %v1211
    %v1213 = vmul.f32 %v1200, 1.442695
    %v1214 = vpow.pop %v1213
    %v1215 = vmul.f32 %v1201, 1.442695
    %v1216 = vpow.pop %v1215
    %v1217 = vmul.f32 %v1202, 1.442695
    %v1218 = vpow.pop %v1217
    %1219 = vadd.xlane.f32.xlu0 %v1204
    %v1220 = vpop.xlane.xlu0 %1219
    %1221 = vadd.xlane.f32.xlu0 %v1206
    %v1222 = vpop.xlane.xlu0 %1221
    %1223 = vadd.xlane.f32.xlu0 %v1208
    %v1224 = vpop.xlane.xlu0 %1223
    %1225 = vadd.xlane.f32.xlu0 %v1210
    %v1226 = vpop.xlane.xlu0 %1225
    %1227 = vadd.xlane.f32.xlu0 %v1212
    %v1228 = vpop.xlane.xlu0 %1227
    %1229 = vadd.xlane.f32.xlu0 %v1214
    %v1230 = vpop.xlane.xlu0 %1229
    %1231 = vadd.xlane.f32.xlu0 %v1216
    %v1232 = vpop.xlane.xlu0 %1231
    %1233 = vadd.xlane.f32.xlu0 %v1218
    %v1234 = vpop.xlane.xlu0 %1233
    %v1235 = vlog2.pop %v1220
    %v1236 = vmul.f32 %v1235, 0.6931472
    %v1237 = vlog2.pop %v1222
    %v1238 = vmul.f32 %v1237, 0.6931472
    %v1239 = vlog2.pop %v1224
    %v1240 = vmul.f32 %v1239, 0.6931472
    %v1241 = vlog2.pop %v1226
    %v1242 = vmul.f32 %v1241, 0.6931472
    %v1243 = vlog2.pop %v1228
    %v1244 = vmul.f32 %v1243, 0.6931472
    %v1245 = vlog2.pop %v1230
    %v1246 = vmul.f32 %v1245, 0.6931472
    %v1247 = vlog2.pop %v1232
    %v1248 = vmul.f32 %v1247, 0.6931472
    %v1249 = vlog2.pop %v1234
    %v1250 = vmul.f32 %v1249, 0.6931472
    %v1251 = vsub.f32 %v1195, %v1236
    %v1252 = vsub.f32 %v1196, %v1238
    %v1253 = vsub.f32 %v1197, %v1240
    %v1254 = vsub.f32 %v1198, %v1242
    %v1255 = vsub.f32 %v1199, %v1244
    %v1256 = vsub.f32 %v1200, %v1246
    %v1257 = vsub.f32 %v1201, %v1248
    %v1258 = vsub.f32 %v1202, %v1250
    %1259 = vst [vmem:[#allocation5] sm:$0xff] %v1251
    %1260 = vst [vmem:[#allocation5 + $0x8] sm:$0xff] %v1252
    %1261 = vst [vmem:[#allocation5 + $0x10] sm:$0xff] %v1253
    %1262 = vst [vmem:[#allocation5 + $0x18] sm:$0xff] %v1254
    %1263 = vst [vmem:[#allocation5 + $0x20] sm:$0xff] %v1255
    %1264 = vst [vmem:[#allocation5 + $0x28] sm:$0xff] %v1256
    %1265 = vst [vmem:[#allocation5 + $0x30] sm:$0xff] %v1257
    %1266 = vst [vmem:[#allocation5 + $0x38] sm:$0xff] %v1258
    %1267 = vst.msk [vmem:[#allocation6] sm:$0xff] %vm432, %v671
    %1268 = vst.msk [vmem:[#allocation6 + $0x8] sm:$0xff] %vm432, %v672
    %1269 = vst.msk [vmem:[#allocation6 + $0x10] sm:$0xff] %vm432, %v673
    %1270 = vst.msk [vmem:[#allocation6 + $0x18] sm:$0xff] %vm432, %v674
    %1271 = vst.msk [vmem:[#allocation6 + $0x20] sm:$0xff] %vm432, %v675
    %1272 = vst.msk [vmem:[#allocation6 + $0x28] sm:$0xff] %vm432, %v676
    %1273 = vst.msk [vmem:[#allocation6 + $0x30] sm:$0xff] %vm432, %v677
    %1274 = vst.msk [vmem:[#allocation6 + $0x38] sm:$0xff] %vm432, %v678
    // Predicated region
    $region18: #{tpu_custom_call.1} parent=1 // pred_check
      _
    $region19: #{tpu_custom_call.1} parent=1 // pred_check_branch
      %1276 = sbr.rel (0) target = $region21
    $region20: #{tpu_custom_call.1} parent=1 // pred_region
      %s1278 = ssub.s32 1024, 1024
      %1279 = vsyncadd [#allocation4], %s1278
      %s1280 = sshll.u32 [#allocation5], 4
      %s1281 = int_to_ptr.vmem [resolvable:$true] %s1280
      %1286 = dma.vmem_to_hbm [thread:$0]  %s1281, 1024, %s3, [#allocation4], 128, 128, 8
    $region21: #{tpu_custom_call.1} parent=1 // pred_fallthru
      _
    // Predicated region
    $region22: #{tpu_custom_call.1} parent=1 // pred_check
      _
    $region23: #{tpu_custom_call.1} parent=1 // pred_check_branch
      %1288 = sbr.rel (0) target = $region25
    $region24: #{tpu_custom_call.1} parent=1 // pred_region
      %s1290 = ssub.s32 1024, 1024
      %1291 = vsyncadd [#allocation7], %s1290
      %s1292 = sshll.u32 [#allocation6], 4
      %s1293 = int_to_ptr.vmem [resolvable:$true] %s1292
      %1298 = dma.vmem_to_hbm [thread:$0]  %s1293, 1024, %s4, [#allocation7], 128, 128, 8
    $region25: #{tpu_custom_call.1} parent=1 // pred_fallthru
      _
    // Predicated region
    $region26: #{tpu_custom_call.1} parent=1 // pred_check
      _
    $region27: #{tpu_custom_call.1} parent=1 // pred_check_branch
      %1300 = sbr.rel (0) target = $region29
    $region28: #{tpu_custom_call.1} parent=1 // pred_region
      %1301 = dma.done [#allocation4], 1024
    $region29: #{tpu_custom_call.1} parent=1 // pred_fallthru
      _
    // Predicated region
    $region30: #{tpu_custom_call.1} parent=1 // pred_check
      _
    $region31: #{tpu_custom_call.1} parent=1 // pred_check_branch
      %1303 = sbr.rel (0) target = $region33
    $region32: #{tpu_custom_call.1} parent=1 // pred_region
      %1304 = dma.done [#allocation7], 1024
    $region33: #{tpu_custom_call.1} parent=1 // pred_fallthru
      _
    %1305 = vsyncpa [#allocation3], 1
    %1306 = vsyncpa [#allocation4], 1
    %1307 = vsyncpa [#allocation7], 1

</llo_original>
